<compile_context>
chip_gen: v7x
topology: tpu7x:2x2x1
jax: 0.10.0
libtpu: 0.0.40
codegen_flags: <defaults>
</compile_context>

<pallas_src>
import functools

import jax
import jax.numpy as jnp
from jax.experimental import pallas as pl
from jax.experimental.pallas import tpu as pltpu


def _round_up(x, m):
    return ((x + m - 1) // m) * m


def _tpu_vmem_capacity_bytes():
    """Physical VMEM capacity (generation-aware), with a conservative fallback."""
    cap = 64 * 1024 * 1024  # conservative default: v7x physical VMEM
    try:
        info = pltpu.get_tpu_info()
        cap = int(getattr(info, "vmem_capacity_bytes", cap) or cap)
    except Exception:
        pass
    return cap


# --------------------------------------------------------------------------
# Fused path: the whole batch (N) fits in a single VMEM block per feature tile.
# --------------------------------------------------------------------------
def _bn1d_fused_kernel(momentum, x_ref, rm_ref, w_ref, b_ref, out_ref, new_rm_ref):
    x = x_ref[...].astype(jnp.float32)            # (N, tile_c)
    mean = jnp.mean(x, axis=0, keepdims=True)     # (1, tile_c), per-lane reduction
    new_rm_ref[...] = momentum * rm_ref[...] + (1.0 - momentum) * mean
    out_ref[...] = ((x - mean) * w_ref[...] + b_ref[...]).astype(out_ref.dtype)


# --------------------------------------------------------------------------
# Two-phase path (large N): pass 1 = per-feature mean + running-mean update,
# pass 2 = centering + affine. x is read twice, but tile_c stays large.
# --------------------------------------------------------------------------
def _bn1d_mean_kernel(momentum, inv_n, n_total, tile_n, need_mask,
                      x_ref, rm_ref, mean_ref, new_rm_ref, acc_ref):
    n = pl.program_id(1)

    @pl.when(n == 0)
    def _():
        acc_ref[...] = jnp.zeros_like(acc_ref)

    x = x_ref[...].astype(jnp.float32)            # (tile_n, tile_c)
    if need_mask:
        # Last N-block may be partial: zero out the garbage rows before summing.
        rows = jax.lax.broadcasted_iota(jnp.int32, x.shape, 0) + n * tile_n
        x = jnp.where(rows < n_total, x, 0.0)
    acc_ref[...] += jnp.sum(x, axis=0, keepdims=True)

    @pl.when(n == pl.num_programs(1) - 1)
    def _():
        mean = acc_ref[...] * inv_n
        mean_ref[...] = mean
        new_rm_ref[...] = momentum * rm_ref[...] + (1.0 - momentum) * mean


def _bn1d_apply_kernel(x_ref, mean_ref, w_ref, b_ref, out_ref):
    x = x_ref[...].astype(jnp.float32)
    out_ref[...] = ((x - mean_ref[...]) * w_ref[...] + b_ref[...]).astype(out_ref.dtype)


# --------------------------------------------------------------------------
# Tile selection
# --------------------------------------------------------------------------
def _select_fused_tile_c(N, C, budget):
    """Feature-tile width for the fused path, or None if it doesn't fit VMEM."""
    # x + out double-buffered in f32 dominate; +small (1, tile_c) param buffers.
    per_col = 2 * 2 * N * 4 + 64
    c128 = _round_up(C, 128)
    if C <= 128:
        # Single tile covering all features (block dim == full array dim is legal).
        return C if per_col * C <= budget else None
    max_cols = (budget // per_col) // 128 * 128
    if max_cols < 128:
        return None                                   # fused path would overflow VMEM
    tile_c = min(c128, max_cols)
    # Guarantee >= 2 feature tiles so the parallel axis can shard across
    # v7x's two TensorCores.
    if tile_c >= c128 and c128 >= 256:
        tile_c = (c128 // 2) // 128 * 128
    return tile_c


def _select_two_phase_tiles(N, C, budget):
    c128 = _round_up(C, 128)
    if C <= 128:
        tile_c = C
    else:
        tile_c = min(512, c128)
        if tile_c >= c128 and c128 >= 256:            # >= 2 feature tiles for megacore
            tile_c = (c128 // 2) // 128 * 128
    # Phase-2 working set dominates: double-buffered x + out tiles (f32).
    per_row = 2 * 2 * tile_c * 4
    tile_n = max(8, (budget // per_row) // 8 * 8)
    if tile_n >= N:
        tile_n = N                                    # full batch dim is always legal
    return tile_n, tile_c


# --------------------------------------------------------------------------
# Wrapper
# --------------------------------------------------------------------------
def batchnorm1d_centering(x, running_mean, weight, bias, *, momentum=0.1,
                          vmem_budget_bytes=None, force_two_phase=False):
    """x: (N, C). Returns (output (N, C), new_running_mean (C,) float32)."""
    N, C = x.shape
    momentum = float(momentum)

    cap = _tpu_vmem_capacity_bytes()
    if vmem_budget_bytes is None:
        # ~70% of physical VMEM: ~45 MiB on v7x (64 MiB), ~90 MiB on v5e/v6e (128 MiB).
        vmem_budget_bytes = int(cap * 0.7)
    vmem_limit = min(int(cap * 0.9), max(vmem_budget_bytes + (8 << 20), 32 << 20))

    rm2 = running_mean.reshape(1, C).astype(jnp.float32)
    w2 = weight.reshape(1, C).astype(jnp.float32)
    b2 = bias.reshape(1, C).astype(jnp.float32)

    fused_tile_c = None if force_two_phase else _select_fused_tile_c(N, C, vmem_budget_bytes)

    if fused_tile_c is not None:
        tile_c = fused_tile_c
        nc = pl.cdiv(C, tile_c)
        out, new_rm = pl.pallas_call(
            functools.partial(_bn1d_fused_kernel, momentum),
            out_shape=(
                jax.ShapeDtypeStruct((N, C), x.dtype),
                jax.ShapeDtypeStruct((1, C), jnp.float32),
            ),
            grid_spec=pltpu.PrefetchScalarGridSpec(
                num_scalar_prefetch=0,
                grid=(nc,),
                in_specs=[
                    pl.BlockSpec((N, tile_c), lambda c: (0, c)),
                    pl.BlockSpec((1, tile_c), lambda c: (0, c)),
                    pl.BlockSpec((1, tile_c), lambda c: (0, c)),
                    pl.BlockSpec((1, tile_c), lambda c: (0, c)),
                ],
                out_specs=[
                    pl.BlockSpec((N, tile_c), lambda c: (0, c)),
                    pl.BlockSpec((1, tile_c), lambda c: (0, c)),
                ],
            ),
            compiler_params=pltpu.CompilerParams(
                dimension_semantics=("parallel",),
                vmem_limit_bytes=vmem_limit,
            ),
        )(x, rm2, w2, b2)
        return out, new_rm[0]

    # ---- two-phase (N-tiled) path ---------------------------------------
    tile_n, tile_c = _select_two_phase_tiles(N, C, vmem_budget_bytes)
    nc = pl.cdiv(C, tile_c)
    nn = pl.cdiv(N, tile_n)
    need_mask = (N % tile_n) != 0

    mean, new_rm = pl.pallas_call(
        functools.partial(_bn1d_mean_kernel, momentum, 1.0 / N, N, tile_n, need_mask),
        out_shape=(
            jax.ShapeDtypeStruct((1, C), jnp.float32),
            jax.ShapeDtypeStruct((1, C), jnp.float32),
        ),
        grid_spec=pltpu.PrefetchScalarGridSpec(
            num_scalar_prefetch=0,
            grid=(nc, nn),
            in_specs=[
                pl.BlockSpec((tile_n, tile_c), lambda c, n: (n, c)),
                pl.BlockSpec((1, tile_c), lambda c, n: (0, c)),
            ],
            out_specs=[
                pl.BlockSpec((1, tile_c), lambda c, n: (0, c)),
                pl.BlockSpec((1, tile_c), lambda c, n: (0, c)),
            ],
            scratch_shapes=[pltpu.VMEM((1, tile_c), jnp.float32)],
        ),
        compiler_params=pltpu.CompilerParams(
            dimension_semantics=("parallel", "arbitrary"),
            vmem_limit_bytes=vmem_limit,
        ),
    )(x, rm2)

    out = pl.pallas_call(
        _bn1d_apply_kernel,
        out_shape=jax.ShapeDtypeStruct((N, C), x.dtype),
        grid_spec=pltpu.PrefetchScalarGridSpec(
            num_scalar_prefetch=0,
            grid=(nc, nn),
            in_specs=[
                pl.BlockSpec((tile_n, tile_c), lambda c, n: (n, c)),
                pl.BlockSpec((1, tile_c), lambda c, n: (0, c)),
                pl.BlockSpec((1, tile_c), lambda c, n: (0, c)),
                pl.BlockSpec((1, tile_c), lambda c, n: (0, c)),
            ],
            out_specs=pl.BlockSpec((tile_n, tile_c), lambda c, n: (n, c)),
        ),
        compiler_params=pltpu.CompilerParams(
            dimension_semantics=("parallel", "parallel"),
            vmem_limit_bytes=vmem_limit,
        ),
    )(x, mean, w2, b2)

    return out, new_rm[0]


def reference(x, running_mean, weight, bias, momentum=0.1):
    mean = jnp.mean(x, axis=0, keepdims=True)
    new_rm = momentum * running_mean.reshape(1, -1) + (1.0 - momentum) * mean
    out = (x - mean) * weight.reshape(1, -1) + bias.reshape(1, -1)
    return out, new_rm[0]


if __name__ == "__main__":
    key = jax.random.PRNGKey(0)
    kx, kw, kb, kr, kx2 = jax.random.split(key, 5)

    # ---- fused path: batch=8, num_features=32 ----------------------------
    N, C = 8, 32
    x = jax.random.normal(kx, (N, C), dtype=jnp.float32)
    weight = jax.random.normal(kw, (C,), dtype=jnp.float32)
    bias = jax.random.normal(kb, (C,), dtype=jnp.float32)
    running_mean = jax.random.normal(kr, (C,), dtype=jnp.float32)

    out, new_rm = batchnorm1d_centering(x, running_mean, weight, bias, momentum=0.1)
    out = jax.block_until_ready(out)
    new_rm = jax.block_until_ready(new_rm)
    ref_out, ref_rm = reference(x, running_mean, weight, bias, momentum=0.1)
    assert jnp.allclose(out, ref_out, atol=1e-5, rtol=1e-5)
    assert jnp.allclose(new_rm, ref_rm, atol=1e-5, rtol=1e-5)

    # ---- two-phase (large-N) path, forced at a small shape so the test is
    # fast; 72 % 32 != 0 also exercises the partial-N-block masking ---------
    N2, C2 = 72, 256
    x2 = jax.random.normal(kx2, (N2, C2), dtype=jnp.float32)
    w2 = jnp.linspace(0.5, 1.5, C2, dtype=jnp.float32)
    b2 = jnp.linspace(-1.0, 1.0, C2, dtype=jnp.float32)
    rm2 = jnp.linspace(-0.5, 0.5, C2, dtype=jnp.float32)
    out2, new_rm2 = batchnorm1d_centering(
        x2, rm2, w2, b2, momentum=0.1,
        force_two_phase=True, vmem_budget_bytes=64 * 1024)
    out2 = jax.block_until_ready(out2)
    new_rm2 = jax.block_until_ready(new_rm2)
    ref_out2, ref_rm2 = reference(x2, rm2, w2, b2, momentum=0.1)
    assert jnp.allclose(out2, ref_out2, atol=1e-5, rtol=1e-5)
    assert jnp.allclose(new_rm2, ref_rm2, atol=1e-5, rtol=1e-5)

    print("KERNEL_OK")
</pallas_src>

<mosaic_0001>
module attributes {stable_mosaic.version = 11 : i64} {
  func.func @_bn1d_fused_kernel(%arg0: i32, %arg1: memref<8x32xf32, #tpu.memory_space<vmem>>, %arg2: memref<1x32xf32, #tpu.memory_space<vmem>>, %arg3: memref<1x32xf32, #tpu.memory_space<vmem>>, %arg4: memref<1x32xf32, #tpu.memory_space<vmem>>, %arg5: memref<8x32xf32, #tpu.memory_space<vmem>>, %arg6: memref<1x32xf32, #tpu.memory_space<vmem>>) attributes {dimension_semantics = [#tpu.dimension_semantics<parallel>], iteration_bounds = array<i64: 1>, scalar_prefetch = 0 : i64, scratch_operands = 0 : i64, tpu.core_type = #tpu.core_type<tc>, window_params = [{transform_indices = @transform_0, window_bounds = array<i64: 8, 32>}, {transform_indices = @transform_1, window_bounds = array<i64: 1, 32>}, {transform_indices = @transform_2, window_bounds = array<i64: 1, 32>}, {transform_indices = @transform_3, window_bounds = array<i64: 1, 32>}, {transform_indices = @transform_4, window_bounds = array<i64: 8, 32>}, {transform_indices = @transform_5, window_bounds = array<i64: 1, 32>}]} {
    %c0 = arith.constant 0 : index
    %c0_0 = arith.constant 0 : index
    %0 = vector.load %arg1[%c0, %c0_0] : memref<8x32xf32, #tpu.memory_space<vmem>>, vector<8x32xf32>
    %cst = arith.constant dense<0.000000e+00> : vector<32xf32>
    %1 = vector.multi_reduction <add>, %0, %cst [0] : vector<8x32xf32> to vector<32xf32>
    %2 = vector.shape_cast %1 : vector<32xf32> to vector<1x32xf32>
    %cst_1 = arith.constant 8.000000e+00 : f32
    %3 = vector.broadcast %cst_1 : f32 to vector<1x32xf32>
    %4 = arith.divf %2, %3 : vector<1x32xf32>
    %c0_2 = arith.constant 0 : index
    %c0_3 = arith.constant 0 : index
    %5 = vector.load %arg2[%c0_2, %c0_3] : memref<1x32xf32, #tpu.memory_space<vmem>>, vector<1x32xf32>
    %cst_4 = arith.constant 1.000000e-01 : f32
    %6 = vector.broadcast %cst_4 : f32 to vector<1x32xf32>
    %7 = arith.mulf %6, %5 : vector<1x32xf32>
    %cst_5 = arith.constant 0.899999976 : f32
    %8 = vector.broadcast %cst_5 : f32 to vector<1x32xf32>
    %9 = arith.mulf %8, %4 : vector<1x32xf32>
    %10 = arith.addf %7, %9 : vector<1x32xf32>
    %c0_6 = arith.constant 0 : index
    %c0_7 = arith.constant 0 : index
    %11 = vector.load %arg6[%c0_6, %c0_7] : memref<1x32xf32, #tpu.memory_space<vmem>>, vector<1x32xf32>
    tpu.vector_store %arg6[%c0_6, %c0_7], %10 {strides = array<i32>} : memref<1x32xf32, #tpu.memory_space<vmem>>, vector<1x32xf32>,
    %12 = vector.broadcast %4 : vector<1x32xf32> to vector<8x32xf32>
    %13 = arith.subf %0, %12 : vector<8x32xf32>
    %c0_8 = arith.constant 0 : index
    %c0_9 = arith.constant 0 : index
    %14 = vector.load %arg3[%c0_8, %c0_9] : memref<1x32xf32, #tpu.memory_space<vmem>>, vector<1x32xf32>
    %15 = vector.broadcast %14 : vector<1x32xf32> to vector<8x32xf32>
    %16 = arith.mulf %13, %15 : vector<8x32xf32>
    %c0_10 = arith.constant 0 : index
    %c0_11 = arith.constant 0 : index
    %17 = vector.load %arg4[%c0_10, %c0_11] : memref<1x32xf32, #tpu.memory_space<vmem>>, vector<1x32xf32>
    %18 = vector.broadcast %17 : vector<1x32xf32> to vector<8x32xf32>
    %19 = arith.addf %16, %18 : vector<8x32xf32>
    %c0_12 = arith.constant 0 : index
    %c0_13 = arith.constant 0 : index
    %20 = vector.load %arg5[%c0_12, %c0_13] : memref<8x32xf32, #tpu.memory_space<vmem>>, vector<8x32xf32>
    tpu.vector_store %arg5[%c0_12, %c0_13], %19 {strides = array<i32>} : memref<8x32xf32, #tpu.memory_space<vmem>>, vector<8x32xf32>,
    return
  }
  func.func @transform_0(%arg0: i32) -> (i32, i32) {
    %c0_i32 = arith.constant 0 : i32
    %c0_i32_0 = arith.constant 0 : i32
    return %c0_i32, %arg0 : i32, i32
  }
  func.func @transform_1(%arg0: i32) -> (i32, i32) {
    %c0_i32 = arith.constant 0 : i32
    %c0_i32_0 = arith.constant 0 : i32
    return %c0_i32, %arg0 : i32, i32
  }
  func.func @transform_2(%arg0: i32) -> (i32, i32) {
    %c0_i32 = arith.constant 0 : i32
    %c0_i32_0 = arith.constant 0 : i32
    return %c0_i32, %arg0 : i32, i32
  }
  func.func @transform_3(%arg0: i32) -> (i32, i32) {
    %c0_i32 = arith.constant 0 : i32
    %c0_i32_0 = arith.constant 0 : i32
    return %c0_i32, %arg0 : i32, i32
  }
  func.func @transform_4(%arg0: i32) -> (i32, i32) {
    %c0_i32 = arith.constant 0 : i32
    %c0_i32_0 = arith.constant 0 : i32
    return %c0_i32, %arg0 : i32, i32
  }
  func.func @transform_5(%arg0: i32) -> (i32, i32) {
    %c0_i32 = arith.constant 0 : i32
    %c0_i32_0 = arith.constant 0 : i32
    return %c0_i32, %arg0 : i32, i32
  }
}

</mosaic_0001>

<llo_original>
// kernel: tpu_custom_call.1
$region0: #{tpu_custom_call.1}
  #allocation0 [shape = 'u32[]', space=smem, size = 0x4, offset = 0x4, fixed_abs, tag = 'smem constant byte address 0x4 - core index']
  #allocation1 [shape = 'u32[144,128]{1,0:T(1,128)}', space=vmem, size = 0x12000, scoped, tag = 'internal scratch']
  %s0 = inlined_call_operand.hbm [shape: f32[8,32], index: 0, kind: input, shape index: {}]
  %s1 = inlined_call_operand.vmem [shape: f32[1,32], index: 1, kind: input, shape index: {}]
  %s2 = inlined_call_operand.vmem [shape: f32[1,32], index: 2, kind: input, shape index: {}]
  %s3 = inlined_call_operand.vmem [shape: f32[1,32], index: 3, kind: input, shape index: {}]
  %s4 = inlined_call_operand.hbm [shape: f32[8,32], index: 4, kind: output, shape index: {0}]
  %s5 = inlined_call_operand.hbm [shape: f32[1,32], index: 5, kind: output, shape index: {1}]
  %6 = xla_tuple %s4, %s5
  %s7 = sld [smem:[#allocation0]]
  $region38: #{tpu_custom_call.1} parent=0
    _
  %s9 = ssub.s32 1, %s7
  %s10 = scalar_select 0, %s9, %s7
  $region1: #{tpu_custom_call.1} parent=0
    #allocation2 [shape = 'u8[4096]{0}', space=vmem, size = 0x1000, scoped, tag = 'input window, operand 0, single buffered']
    #allocation3 [shape = 's32[1]{0}', space=sflag, size = 0x4, scoped, tag = 'scoped memory for tpu_custom_call.1']
    #allocation4 [shape = 's32[1]{0}', space=sflag, size = 0x4, scoped, tag = 'scoped memory for tpu_custom_call.1']
    #allocation5 [shape = 'u8[4096]{0}', space=vmem, size = 0x1000, scoped, tag = 'output window, operand 0, single buffered']
    #allocation6 [shape = 'u8[512]{0}', space=vmem, size = 0x400, scoped, tag = 'output window, operand 1, single buffered']
    #allocation7 [shape = 's32[1]{0}', space=sflag, size = 0x4, scoped, tag = 'scoped memory for tpu_custom_call.1']
    %11 = vsyncpa [#allocation3], 0
    %12 = vsyncpa [#allocation4], 0
    %13 = vsyncpa [#allocation7], 0
    // Predicated region
    $region2: #{tpu_custom_call.1} parent=1 // pred_check
      _
    $region3: #{tpu_custom_call.1} parent=1 // pred_check_branch
      %15 = sbr.rel (0) target = $region5
    $region4: #{tpu_custom_call.1} parent=1 // pred_region
      %s17 = ssub.s32 128, 128
      %18 = vsyncadd [#allocation3], %s17
      %s20 = sshll.u32 [#allocation2], 4
      %s21 = int_to_ptr.vmem [resolvable:$true] %s20
      %23 = dma.hbm_to_vmem [thread:$0]  %s0, 128, %s21, [#allocation3]
    $region5: #{tpu_custom_call.1} parent=1 // pred_fallthru
      _
    // Predicated region
    $region6: #{tpu_custom_call.1} parent=1 // pred_check
      _
    $region7: #{tpu_custom_call.1} parent=1 // pred_check_branch
      %25 = sbr.rel (0) target = $region9
    $region8: #{tpu_custom_call.1} parent=1 // pred_region
      _
    $region9: #{tpu_custom_call.1} parent=1 // pred_fallthru
      _
    // Predicated region
    $region10: #{tpu_custom_call.1} parent=1 // pred_check
      _
    $region11: #{tpu_custom_call.1} parent=1 // pred_check_branch
      %27 = sbr.rel (0) target = $region13
    $region12: #{tpu_custom_call.1} parent=1 // pred_region
      _
    $region13: #{tpu_custom_call.1} parent=1 // pred_fallthru
      _
    // Predicated region
    $region14: #{tpu_custom_call.1} parent=1 // pred_check
      _
    $region15: #{tpu_custom_call.1} parent=1 // pred_check_branch
      %29 = sbr.rel (0) target = $region17
    $region16: #{tpu_custom_call.1} parent=1 // pred_region
      _
    $region17: #{tpu_custom_call.1} parent=1 // pred_fallthru
      _
    // Predicated region
    $region18: #{tpu_custom_call.1} parent=1 // pred_check
      _
    $region19: #{tpu_custom_call.1} parent=1 // pred_check_branch
      %31 = sbr.rel (0) target = $region21
    $region20: #{tpu_custom_call.1} parent=1 // pred_region
      %32 = dma.done [#allocation3], 128
    $region21: #{tpu_custom_call.1} parent=1 // pred_fallthru
      _
    %v33 = vld [vmem:[#allocation2] sm:$0xff]
    %vm34 = vcmask 261120
    %v35 = vsel %vm34, %v33, 0.0
    %v36 = vrot.slane %v35, 4
    %v37 = vadd.f32 %v35, %v36
    %v38 = vrot.slane %v37, 2
    %v39 = vadd.f32 %v37, %v38
    %v40 = vrot.slane %v39, 1
    %v41 = vadd.f32 %v39, %v40
    %v42 = vrcp.pop 8.0
    %v43 = vmul.f32 %v41, %v42
    %v44 = vld [vmem:[%s1] sm:$0x1]
    %v45 = vmul.f32 %v44, 0.1
    %v46 = vmul.f32 %v43, 0.9
    %v47 = vadd.f32 %v45, %v46
    %vm48 = vcmask 253952
    %49 = vst.msk [vmem:[#allocation6] sm:$0x1] %vm48, %v47
    %v50 = vsub.f32 %v33, %v43
    %v51 = vld [vmem:[%s2] sm:$0x1]
    %v53 = vlaneseq
    %v54 = vshrl.u32 %v53, 7
    %v55 = vsub.s32 0, %v54
    %v56 = vrot.slane %v51, %v55
    %v58 = vmul.f32 %v50, %v56
    %v59 = vld [vmem:[%s3] sm:$0x1]
    %v61 = vlaneseq
    %v62 = vshrl.u32 %v61, 7
    %v63 = vsub.s32 0, %v62
    %v64 = vrot.slane %v59, %v63
    %v66 = vadd.f32 %v58, %v64
    %67 = vst.msk [vmem:[#allocation5] sm:$0xff] %vm34, %v66
    // Predicated region
    $region22: #{tpu_custom_call.1} parent=1 // pred_check
      _
    $region23: #{tpu_custom_call.1} parent=1 // pred_check_branch
      %69 = sbr.rel (0) target = $region25
    $region24: #{tpu_custom_call.1} parent=1 // pred_region
      %s71 = ssub.s32 128, 128
      %72 = vsyncadd [#allocation4], %s71
      %s74 = sshll.u32 [#allocation5], 4
      %s75 = int_to_ptr.vmem [resolvable:$true] %s74
      %77 = dma.vmem_to_hbm [thread:$0]  %s75, 128, %s4, [#allocation4]
    $region25: #{tpu_custom_call.1} parent=1 // pred_fallthru
      _
    // Predicated region
    $region26: #{tpu_custom_call.1} parent=1 // pred_check
      _
    $region27: #{tpu_custom_call.1} parent=1 // pred_check_branch
      %79 = sbr.rel (0) target = $region29
    $region28: #{tpu_custom_call.1} parent=1 // pred_region
      %s81 = ssub.s32 16, 16
      %82 = vsyncadd [#allocation7], %s81
      %s84 = sshll.u32 [#allocation6], 4
      %s85 = int_to_ptr.vmem [resolvable:$true] %s84
      %87 = dma.vmem_to_hbm [thread:$0]  %s85, 16, %s5, [#allocation7]
    $region29: #{tpu_custom_call.1} parent=1 // pred_fallthru
      _
    // Predicated region
    $region30: #{tpu_custom_call.1} parent=1 // pred_check
      _
    $region31: #{tpu_custom_call.1} parent=1 // pred_check_branch
      %89 = sbr.rel (0) target = $region33
    $region32: #{tpu_custom_call.1} parent=1 // pred_region
      %90 = dma.done [#allocation4], 128
    $region33: #{tpu_custom_call.1} parent=1 // pred_fallthru
      _
    // Predicated region
    $region34: #{tpu_custom_call.1} parent=1 // pred_check
      _
    $region35: #{tpu_custom_call.1} parent=1 // pred_check_branch
      %92 = sbr.rel (0) target = $region37
    $region36: #{tpu_custom_call.1} parent=1 // pred_region
      %93 = dma.done [#allocation7], 16
    $region37: #{tpu_custom_call.1} parent=1 // pred_fallthru
      _
    %94 = vsyncpa [#allocation3], 1
    %95 = vsyncpa [#allocation4], 1
    %96 = vsyncpa [#allocation7], 1

</llo_original>
